<compile_context>
chip_gen: v5e
topology: v5e:2x2
jax: 0.10.0
libtpu: 0.0.40
codegen_flags: <defaults>
</compile_context>

<pallas_src>
import functools

import jax
import jax.numpy as jnp
from jax import lax
from jax.experimental import pallas as pl
from jax.experimental.pallas import tpu as pltpu

LANES = 128
SUBLANES = 8


def _num_tensorcores_per_chip():
    """Best-effort TensorCore-per-chip count: 2 on v7x-class chips, else 1."""
    try:
        kind = jax.devices()[0].device_kind.lower()
    except Exception:
        return 1
    if any(tag in kind for tag in ("v7", "tpu7", "7x")):
        return 2
    return 1


def _iou_sums_kernel(p_ref, t_ref, acc_ref, *, rows, block_rows,
                     steps_per_split, chunk_rows, unroll, needs_mask):
    """Accumulate per-split partial sums of (p*t) and (p+t).

    acc_ref block: (1, 2, 8, 128) f32; index 0 holds intersection partials,
    index 1 holds total partials. The block is VMEM-resident across the inner
    (arbitrary) grid axis and written back to HBM once per split.
    """
    i = pl.program_id(1)

    @pl.when(i == 0)
    def _init():
        acc_ref[...] = jnp.zeros_like(acc_ref)

    n_chunks = block_rows // chunk_rows  # static

    def accumulate(mask_base):
        # mask_base is None for the clean path; otherwise it is the (traced)
        # global row index of the first row of this block.
        def body(c, carry):
            acc_i, acc_t = carry
            off = pl.multiple_of(c * chunk_rows, chunk_rows)
            pc = p_ref[pl.ds(off, chunk_rows), :].astype(jnp.float32)
            tc = t_ref[pl.ds(off, chunk_rows), :].astype(jnp.float32)
            if mask_base is not None:
                rid = (mask_base + off
                       + lax.broadcasted_iota(jnp.int32, (chunk_rows, LANES), 0))
                valid = rid < rows
                # Mask BEFORE the multiply so unspecified Pallas padding in
                # partial/redundant blocks cannot inject NaN/Inf.
                pc = jnp.where(valid, pc, 0.0)
                tc = jnp.where(valid, tc, 0.0)
            # Fold (chunk_rows, 128) -> (8, 128): pure vreg VPU adds, everything
            # stays in registers (no multi-MiB intermediates).
            inter = jnp.sum(
                (pc * tc).reshape(chunk_rows // SUBLANES, SUBLANES, LANES), axis=0)
            tot = jnp.sum(
                (pc + tc).reshape(chunk_rows // SUBLANES, SUBLANES, LANES), axis=0)
            return acc_i + inter, acc_t + tot

        zero = jnp.zeros((SUBLANES, LANES), jnp.float32)
        acc_i, acc_t = lax.fori_loop(0, n_chunks, body, (zero, zero),
                                     unroll=unroll)
        acc_ref[0, 0] += acc_i
        acc_ref[0, 1] += acc_t

    if not needs_mask:
        accumulate(None)
    else:
        s = pl.program_id(0)
        base = (s * steps_per_split + i) * block_rows
        is_tail = base + block_rows > rows  # only tail / redundant blocks mask

        @pl.when(jnp.logical_not(is_tail))
        def _clean():
            accumulate(None)

        @pl.when(is_tail)
        def _masked():
            accumulate(base)


def iou_loss(predictions, targets, eps=1e-06, max_block_rows=8192,
             n_splits=None, cast_predictions_to_bf16=False):
    """Pallas equivalent of IoULoss.forward. Returns a scalar float32 loss."""
    p = predictions.reshape(-1)
    t = targets.reshape(-1)
    if cast_predictions_to_bf16:
        # Halves the dominant HBM stream (~1.6-1.8x end-to-end) at ~1e-3
        # relative error on the prediction values; accumulation stays f32.
        p = p.astype(jnp.bfloat16)
    n = p.shape[0]

    # Lane alignment (and a minimum of 16 rows so blocks are f32/bf16
    # tile-aligned). Zero padding is sum-neutral.
    rows = max(pl.cdiv(n, LANES), 16)
    padded = rows * LANES
    if padded != n:
        p = jnp.pad(p, (0, padded - n))
        t = jnp.pad(t, (0, padded - n))
    p2 = p.reshape(rows, LANES)
    t2 = t.reshape(rows, LANES)

    # Split the streaming reduction across real TensorCores only.
    if n_splits is None:
        n_splits = _num_tensorcores_per_chip()
    n_splits = max(1, int(n_splits))

    # Block sizing: large lane-dense tiles, sublane count a multiple of 16 so
    # both f32 and bf16 blocks are tile-aligned.
    max_block_rows = max(16, (int(max_block_rows) // 16) * 16)
    block_rows = min(max_block_rows, rows)
    block_rows -= block_rows % 16
    num_blocks = pl.cdiv(rows, block_rows)

    if n_splits > 1:
        if num_blocks < n_splits:
            n_splits = 1
        elif num_blocks % n_splits != 0:
            # Rebalance so the block count divides evenly across cores:
            # avoids the clamped redundant-block re-read and usually the mask.
            target_blocks = n_splits * pl.cdiv(num_blocks, n_splits)
            block_rows = 16 * pl.cdiv(pl.cdiv(rows, target_blocks), 16)
            num_blocks = pl.cdiv(rows, block_rows)
            if num_blocks < n_splits:
                n_splits = 1

    steps = pl.cdiv(num_blocks, n_splits)
    needs_mask = (n_splits * steps * block_rows) != rows
    needs_clamp = (n_splits * steps) > num_blocks

    def in_index_map(s, i):
        b = s * steps + i
        if needs_clamp:
            # Redundant trailing steps re-read the last real block; their
            # contribution is fully masked to zero inside the kernel.
            b = jnp.minimum(b, num_blocks - 1)
        return (b, 0)

    # Sub-chunking of each block for the in-register fold.
    chunk_rows = 16
    for c in (128, 64, 32):
        if block_rows % c == 0:
            chunk_rows = c
            break
    n_chunks = block_rows // chunk_rows
    if n_chunks <= 8:
        unroll = True
    elif n_chunks % 8 == 0:
        unroll = 8
    elif n_chunks % 4 == 0:
        unroll = 4
    else:
        unroll = 2 if n_chunks % 2 == 0 else 1

    kernel = functools.partial(
        _iou_sums_kernel,
        rows=rows,
        block_rows=block_rows,
        steps_per_split=steps,
        chunk_rows=chunk_rows,
        unroll=unroll,
        needs_mask=needs_mask,
    )

    # Explicit VMEM accounting: 2 double-buffered input streams + headroom.
    in_block_bytes = block_rows * LANES * (p2.dtype.itemsize + t2.dtype.itemsize)
    vmem_bytes = int(min(max(2 * in_block_bytes + (4 << 20), 16 << 20), 96 << 20))

    partial_sums = pl.pallas_call(
        kernel,
        out_shape=jax.ShapeDtypeStruct((n_splits, 2, SUBLANES, LANES),
                                       jnp.float32),
        grid_spec=pltpu.PrefetchScalarGridSpec(
            num_scalar_prefetch=0,
            grid=(n_splits, steps),
            in_specs=[
                pl.BlockSpec((block_rows, LANES), in_index_map),
                pl.BlockSpec((block_rows, LANES), in_index_map),
            ],
            out_specs=pl.BlockSpec((1, 2, SUBLANES, LANES),
                                   lambda s, i: (s, 0, 0, 0)),
        ),
        compiler_params=pltpu.CompilerParams(
            dimension_semantics=("parallel", "arbitrary"),
            vmem_limit_bytes=vmem_bytes,
        ),
    )(p2, t2)

    # Single cheap finalize in the wrapper: cross-lane reduce of 2 * n_splits
    # (8,128) slabs plus the IoU algebra (matches the PyTorch module exactly).
    intersection = jnp.sum(partial_sums[:, 0])
    total = jnp.sum(partial_sums[:, 1])
    union = total - intersection
    iou = intersection / (union + eps)
    return 1.0 - iou


def _reference(predictions, targets, eps=1e-06):
    p = predictions.reshape(-1).astype(jnp.float32)
    t = targets.reshape(-1).astype(jnp.float32)
    intersection = jnp.sum(p * t)
    total = jnp.sum(p + t)
    union = total - intersection
    iou = intersection / (union + eps)
    return 1.0 - iou


if __name__ == "__main__":
    key = jax.random.PRNGKey(0)
    k1, k2, k3, k4 = jax.random.split(key, 4)

    # NCHW inputs as the PyTorch module would receive (then flattened).
    predictions = jax.nn.sigmoid(
        jax.random.normal(k1, (2, 4, 16, 16), dtype=jnp.float32))
    # Binary mask targets passed as bf16: exact for {0,1}, halves that stream.
    targets = (jax.random.uniform(k2, (2, 4, 16, 16)) > 0.5).astype(jnp.bfloat16)

    loss = jax.block_until_ready(jax.jit(iou_loss)(predictions, targets))
    ref = jax.block_until_ready(_reference(predictions, targets))
    assert jnp.allclose(loss, ref, rtol=1e-5, atol=1e-6), (loss, ref)

    # Ragged shape: exercises lane padding, block rebalancing / splitting,
    # the partial last block, and the pl.when-gated in-kernel tail mask.
    p2 = jax.nn.sigmoid(jax.random.normal(k3, (3, 5, 17, 19), dtype=jnp.float32))
    t2 = (jax.random.uniform(k4, (3, 5, 17, 19)) > 0.5).astype(jnp.float32)
    loss2 = jax.block_until_ready(jax.jit(iou_loss)(p2, t2))
    ref2 = jax.block_until_ready(_reference(p2, t2))
    assert jnp.allclose(loss2, ref2, rtol=1e-5, atol=1e-6), (loss2, ref2)

    print("KERNEL_OK")
</pallas_src>

<mosaic_0001>
module attributes {stable_mosaic.version = 11 : i64} {
  func.func @_iou_sums_kernel(%arg0: i32, %arg1: i32, %arg2: memref<16x128xf32, #tpu.memory_space<vmem>>, %arg3: memref<16x128xbf16, #tpu.memory_space<vmem>>, %arg4: memref<1x2x8x128xf32, #tpu.memory_space<vmem>>) attributes {dimension_semantics = [#tpu.dimension_semantics<parallel>, #tpu.dimension_semantics<arbitrary>], iteration_bounds = array<i64: 1, 1>, scalar_prefetch = 0 : i64, scratch_operands = 0 : i64, tpu.core_type = #tpu.core_type<tc>, window_params = [{transform_indices = @transform_0, window_bounds = array<i64: 16, 128>}, {transform_indices = @transform_1, window_bounds = array<i64: 16, 128>}, {transform_indices = @transform_2, window_bounds = array<i64: 1, 2, 8, 128>}]} {
    %c0_i32 = arith.constant 0 : i32
    %0 = arith.cmpi eq, %arg1, %c0_i32 : i32
    %1 = arith.extui %0 : i1 to i32
    %c0_i32_0 = arith.constant 0 : i32
    %2 = arith.cmpi ne, %1, %c0_i32_0 : i32
    scf.if %2 {
      %cst_20 = arith.constant 0.000000e+00 : f32
      %31 = vector.broadcast %cst_20 : f32 to vector<1x2x8x128xf32>
      %c0_21 = arith.constant 0 : index
      %c0_22 = arith.constant 0 : index
      %c0_23 = arith.constant 0 : index
      %c0_24 = arith.constant 0 : index
      %32 = vector.load %arg4[%c0_21, %c0_22, %c0_23, %c0_24] : memref<1x2x8x128xf32, #tpu.memory_space<vmem>>, vector<1x2x8x128xf32>
      tpu.vector_store %arg4[%c0_21, %c0_22, %c0_23, %c0_24], %31 {strides = array<i32>} : memref<1x2x8x128xf32, #tpu.memory_space<vmem>>, vector<1x2x8x128xf32>,
    } else {
    }
    %cst = arith.constant 0.000000e+00 : f32
    %3 = vector.broadcast %cst : f32 to vector<8x128xf32>
    %c0_i32_1 = arith.constant 0 : i32
    %c16_i32 = arith.constant 16 : i32
    %4 = arith.muli %c0_i32_1, %c16_i32 : i32
    %5 = tpu.assume_multiple %4, 16 : i32
    %6 = arith.index_cast %5 : i32 to index
    %c0 = arith.constant 0 : index
    %7 = vector.load %arg2[%6, %c0] : memref<16x128xf32, #tpu.memory_space<vmem>>, vector<16x128xf32>
    %8 = arith.index_cast %5 : i32 to index
    %c0_2 = arith.constant 0 : index
    %9 = vector.load %arg3[%8, %c0_2] : memref<16x128xbf16, #tpu.memory_space<vmem>>, vector<16x128xbf16>
    %10 = arith.extf %9 : vector<16x128xbf16> to vector<16x128xf32>
    %11 = arith.mulf %7, %10 : vector<16x128xf32>
    %12 = vector.shape_cast %11 : vector<16x128xf32> to vector<2x8x128xf32>
    %cst_3 = arith.constant dense<0.000000e+00> : vector<8x128xf32>
    %13 = vector.multi_reduction <add>, %12, %cst_3 [0] : vector<2x8x128xf32> to vector<8x128xf32>
    %14 = arith.addf %7, %10 : vector<16x128xf32>
    %15 = vector.shape_cast %14 : vector<16x128xf32> to vector<2x8x128xf32>
    %cst_4 = arith.constant dense<0.000000e+00> : vector<8x128xf32>
    %16 = vector.multi_reduction <add>, %15, %cst_4 [0] : vector<2x8x128xf32> to vector<8x128xf32>
    %17 = arith.addf %3, %13 : vector<8x128xf32>
    %18 = arith.addf %3, %16 : vector<8x128xf32>
    %c1_i32 = arith.constant 1 : i32
    %c0_5 = arith.constant 0 : index
    %c0_6 = arith.constant 0 : index
    %c0_7 = arith.constant 0 : index
    %c0_8 = arith.constant 0 : index
    %19 = vector.load %arg4[%c0_5, %c0_6, %c0_7, %c0_8] : memref<1x2x8x128xf32, #tpu.memory_space<vmem>>, vector<1x1x8x128xf32>
    %20 = vector.shape_cast %19 : vector<1x1x8x128xf32> to vector<8x128xf32>
    %21 = arith.addf %20, %17 : vector<8x128xf32>
    %c0_9 = arith.constant 0 : index
    %c0_10 = arith.constant 0 : index
    %c0_11 = arith.constant 0 : index
    %c0_12 = arith.constant 0 : index
    %22 = vector.load %arg4[%c0_9, %c0_10, %c0_11, %c0_12] : memref<1x2x8x128xf32, #tpu.memory_space<vmem>>, vector<1x1x8x128xf32>
    %23 = vector.shape_cast %22 : vector<1x1x8x128xf32> to vector<8x128xf32>
    %24 = vector.shape_cast %21 : vector<8x128xf32> to vector<1x1x8x128xf32>
    tpu.vector_store %arg4[%c0_9, %c0_10, %c0_11, %c0_12], %24 {strides = array<i32>} : memref<1x2x8x128xf32, #tpu.memory_space<vmem>>, vector<1x1x8x128xf32>,
    %c0_13 = arith.constant 0 : index
    %c1 = arith.constant 1 : index
    %c0_14 = arith.constant 0 : index
    %c0_15 = arith.constant 0 : index
    %25 = vector.load %arg4[%c0_13, %c1, %c0_14, %c0_15] : memref<1x2x8x128xf32, #tpu.memory_space<vmem>>, vector<1x1x8x128xf32>
    %26 = vector.shape_cast %25 : vector<1x1x8x128xf32> to vector<8x128xf32>
    %27 = arith.addf %26, %18 : vector<8x128xf32>
    %c0_16 = arith.constant 0 : index
    %c1_17 = arith.constant 1 : index
    %c0_18 = arith.constant 0 : index
    %c0_19 = arith.constant 0 : index
    %28 = vector.load %arg4[%c0_16, %c1_17, %c0_18, %c0_19] : memref<1x2x8x128xf32, #tpu.memory_space<vmem>>, vector<1x1x8x128xf32>
    %29 = vector.shape_cast %28 : vector<1x1x8x128xf32> to vector<8x128xf32>
    %30 = vector.shape_cast %27 : vector<8x128xf32> to vector<1x1x8x128xf32>
    tpu.vector_store %arg4[%c0_16, %c1_17, %c0_18, %c0_19], %30 {strides = array<i32>} : memref<1x2x8x128xf32, #tpu.memory_space<vmem>>, vector<1x1x8x128xf32>,
    return
  }
  func.func @transform_0(%arg0: i32, %arg1: i32) -> (i32, i32) {
    %c1_i32 = arith.constant 1 : i32
    %0 = arith.muli %arg0, %c1_i32 : i32
    %1 = arith.addi %0, %arg1 : i32
    %c0_i32 = arith.constant 0 : i32
    %c0_i32_0 = arith.constant 0 : i32
    return %1, %c0_i32 : i32, i32
  }
  func.func @transform_1(%arg0: i32, %arg1: i32) -> (i32, i32) {
    %c1_i32 = arith.constant 1 : i32
    %0 = arith.muli %arg0, %c1_i32 : i32
    %1 = arith.addi %0, %arg1 : i32
    %c0_i32 = arith.constant 0 : i32
    %c0_i32_0 = arith.constant 0 : i32
    return %1, %c0_i32 : i32, i32
  }
  func.func @transform_2(%arg0: i32, %arg1: i32) -> (i32, i32, i32, i32) {
    %c0_i32 = arith.constant 0 : i32
    %c0_i32_0 = arith.constant 0 : i32
    %c0_i32_1 = arith.constant 0 : i32
    %c0_i32_2 = arith.constant 0 : i32
    return %arg0, %c0_i32, %c0_i32_0, %c0_i32_1 : i32, i32, i32, i32
  }
}

</mosaic_0001>

<llo_original>
// kernel: iou_loss.1
$region0: #{iou_loss.1}
  #allocation0 [shape = 'u32[]', space=smem, size = 0x4, offset = 0x4, fixed_abs, tag = 'smem constant byte address 0x4 - core index']
  #allocation1 [shape = 'u32[72,128]{1,0:T(1,128)}', space=vmem, size = 0x9000, scoped, tag = 'internal scratch']
  %s0 = inlined_call_operand.vmem [shape: f32[16,128], index: 0, kind: input, shape index: {}]
  %s1 = inlined_call_operand.vmem [shape: bf16[16,128], index: 1, kind: input, shape index: {}]
  %s2 = inlined_call_operand.vmem [shape: f32[1,2,8,128], index: 2, kind: output, shape index: {}]
  %s3 = sld [smem:[#allocation0]]
  $region22: #{iou_loss.1} parent=0
    _
  %s5 = ssub.s32 1, %s3
  %s6 = scalar_select 0, %s5, %s3
  // Predicated region
  $region2: #{iou_loss.1} parent=0 // pred_check
    _
  $region3: #{iou_loss.1} parent=0 // pred_check_branch
    %8 = sbr.rel (0) target = $region5
  $region4: #{iou_loss.1} parent=0 // pred_region
    %s9 = sadd.s32 0, 0
    %s10 = smul.u32 2, %s9
    %p11 = scmp.lt.s32.totalorder %s10, 1
    %s12 = scalar_select %p11, %s10, 1
    %s13 = smul.addr %s12, 8
    %s14 = scalar_lea.vmem %s0, %s13
    %s15 = sadd.s32 0, 0
    %s16 = smul.u32 2, %s15
  $region5: #{iou_loss.1} parent=0 // pred_fallthru
    _
  // Predicated region
  $region6: #{iou_loss.1} parent=0 // pred_check
    _
  $region7: #{iou_loss.1} parent=0 // pred_check_branch
    %18 = sbr.rel (0) target = $region9
  $region8: #{iou_loss.1} parent=0 // pred_region
    %s19 = sadd.s32 0, 0
    %s20 = smul.u32 2, %s19
    %p21 = scmp.lt.s32.totalorder %s20, 1
    %s22 = scalar_select %p21, %s20, 1
    %s23 = smul.addr %s22, 4
    %s24 = scalar_lea.vmem %s1, %s23
    %s25 = sadd.s32 0, 0
    %s26 = smul.u32 2, %s25
  $region9: #{iou_loss.1} parent=0 // pred_fallthru
    _
  %s27 = sadd.s32 0, 0
  %s28 = smul.u32 2, %s27
  %p29 = scmp.lt.s32.totalorder %s28, 1
  %s30 = scalar_select %p29, %s28, 1
  %s31 = smul.addr %s30, 8
  %s32 = scalar_lea.vmem %s0, %s31
  %s33 = sadd.s32 0, 0
  %s34 = smul.u32 2, %s33
  %p35 = scmp.lt.s32.totalorder %s34, 1
  %s36 = scalar_select %p35, %s34, 1
  %s37 = smul.addr %s36, 4
  %s38 = scalar_lea.vmem %s1, %s37
  %s39 = sadd.s32 0, 0
  %s40 = smul.u32 2, %s39
  %p41 = scmp.lt.s32.totalorder %s40, 1
  %s42 = scalar_select %p41, %s40, 1
  %s43 = smul.addr %s42, 8
  %s44 = scalar_lea.vmem %s0, %s43
  %s45 = sadd.s32 0, 0
  %s46 = smul.u32 2, %s45
  %s47 = sadd.s32 0, 0
  %s48 = smul.u32 2, %s47
  %p49 = scmp.lt.s32.totalorder %s48, 1
  %s50 = scalar_select %p49, %s48, 1
  %s51 = smul.addr %s50, 4
  %s52 = scalar_lea.vmem %s1, %s51
  %s53 = sadd.s32 0, 0
  %s54 = smul.u32 2, %s53
  %p55 = scmp.eq.s32.totalorder 0, 0
  // Predicated region
  $region10: #{iou_loss.1} parent=0 // pred_check
    %p56 = pneg %p55
  $region11: #{iou_loss.1} parent=0 // pred_check_branch
    %58 = sbr.rel (%p56) target = $region13
  $region12: #{iou_loss.1} parent=0 // pred_region
    %59 = vst [vmem:[%s2] sm:$0xff] 0.0
    %60 = vst [vmem:[%s2 + $0x8] sm:$0xff] 0.0
  $region13: #{iou_loss.1} parent=0 // pred_fallthru
    _
  %v61 = vld [vmem:[%s44] sm:$0xff]
  %v62 = vld [vmem:[%s44 + $0x8] sm:$0xff]
  %v63 = vld [vmem:[%s52] sm:$0xf]
  %v64 = vld [vmem:[%s52 + $0x4] sm:$0xf]
  %v65 = vunpack.c.l.bf16 %v63
  %v66 = vunpack.c.l.bf16 %v64
  %v67 = vmul.f32 %v61, %v65
  %v68 = vmul.f32 %v62, %v66
  %v69 = vadd.f32 %v67, %v68
  %v70 = vadd.f32 %v61, %v65
  %v71 = vadd.f32 %v62, %v66
  %v72 = vadd.f32 %v70, %v71
  %v73 = vadd.f32 %v69, 0.0
  %v74 = vadd.f32 %v72, 0.0
  %v75 = vld [vmem:[%s2] sm:$0xff]
  %v76 = vadd.f32 %v75, %v73
  %77 = vst [vmem:[%s2] sm:$0xff] %v76
  %s78 = scalar_lea.vmem %s2, 8
  %v79 = vld [vmem:[%s78] sm:$0xff]
  %v80 = vadd.f32 %v79, %v74
  %81 = vst [vmem:[%s78] sm:$0xff] %v80
  // Predicated region
  $region14: #{iou_loss.1} parent=0 // pred_check
    _
  $region15: #{iou_loss.1} parent=0 // pred_check_branch
    %83 = sbr.rel (0) target = $region17
  $region16: #{iou_loss.1} parent=0 // pred_region
    _
  $region17: #{iou_loss.1} parent=0 // pred_fallthru
    _
  // Predicated region
  $region18: #{iou_loss.1} parent=0 // pred_check
    _
  $region19: #{iou_loss.1} parent=0 // pred_check_branch
    %85 = sbr.rel (0) target = $region21
  $region20: #{iou_loss.1} parent=0 // pred_region
    _
  $region21: #{iou_loss.1} parent=0 // pred_fallthru
    _

</llo_original>
